<compile_context>
chip_gen: v6e
topology: v6e:2x2x1
jax: 0.10.0
libtpu: 0.0.40
codegen_flags: <defaults>
</compile_context>

<pallas_src>
import functools

import jax
import jax.numpy as jnp
from jax import lax
from jax.experimental import pallas as pl
from jax.experimental.pallas import tpu as pltpu


def _round_up(x, m):
    return ((x + m - 1) // m) * m


def _lstm_kernel(xz_ref, wh_ref, wd_ref, bd_ref, out_ref,
                 hhist_sc, h_sc, c_sc, *, hidden, chunk, unroll):
    """One CHUNK-step slab of the LSTM recurrence + its batched decoder.

    xz_ref  : (CHUNK, 4H) f32   precomputed input contribution Wx[idx] + b,
                                gates packed at stride H: [f | i | o | g].
    wh_ref  : (H, 4H)    bf16   packed recurrent weights.
    wd_ref  : (H, CP)    bf16   decoder weight (transposed, zero cols >= C).
    bd_ref  : (1, CP)    f32    decoder bias (zero cols >= C).
    out_ref : (CHUNK, CP) f32   decoder logits (lane-dense output).
    hhist_sc: (CHUNK, H) f32    per-chunk h history for the batched decoder.
    h_sc    : (1, H)     bf16   h carried across chunks (grid iterations).
    c_sc    : (1, H)     f32    c carried across chunks.
    """
    H = hidden
    G4 = 4 * H

    @pl.when(pl.program_id(0) == 0)
    def _init():
        h_sc[...] = jnp.zeros_like(h_sc)
        c_sc[...] = jnp.zeros_like(c_sc)

    # sigmoid(x) == 0.5*tanh(0.5*x)+0.5: pre-scale the f/i/o lanes by 0.5 so a
    # SINGLE tanh over the whole packed slab produces every gate activation.
    lane = lax.broadcasted_iota(jnp.int32, (1, G4), 1)
    act_scale = jnp.where(lane < 3 * H, 0.5, 1.0).astype(jnp.float32)

    def step(t, carry):
        h, c = carry                                        # (1,H) bf16 / f32
        # Single MXU tile per step: z = h @ Wh + (Wx[x_t] + b).  Wh is read
        # from VMEM inside the dot (not held live across the unrolled loop).
        z = (jnp.dot(h, wh_ref[...], preferred_element_type=jnp.float32)
             + xz_ref[pl.ds(t, 1), :])                      # (1, 4H) f32

        t_all = jnp.tanh(z * act_scale)                     # one EUP slab
        sig = 0.5 * t_all + 0.5                             # sigmoid on f/i/o

        f = sig[:, 0 * H:1 * H]
        i = sig[:, 1 * H:2 * H]
        o = sig[:, 2 * H:3 * H]
        g = t_all[:, 3 * H:4 * H]

        c_new = f * c + i * g
        h_new = o * jnp.tanh(c_new)
        h_bf = h_new.astype(jnp.bfloat16)                   # next matmul LHS

        hhist_sc[pl.ds(t, 1), :] = h_new                    # off the h->h chain
        return (h_bf, c_new)

    h_fin, c_fin = lax.fori_loop(0, chunk, step, (h_sc[...], c_sc[...]),
                                 unroll=unroll)
    h_sc[...] = h_fin
    c_sc[...] = c_fin

    # Hoisted decoder: one batched matmul + one lane-dense store per chunk.
    hh = hhist_sc[...].astype(jnp.bfloat16)                 # (CHUNK, H)
    out_ref[...] = (jnp.dot(hh, wd_ref[...],
                            preferred_element_type=jnp.float32)
                    + bd_ref[...])


def custom_lstm_forward(input_seq, params, *, char_size, hidden_size,
                        max_chunk=512):
    """Pallas-backed equivalent of CustomLSTM.forward (fresh h=c=0 state).

    input_seq: int32 array of shape (T,) with values in [0, char_size).
    Returns (T, char_size) float32 logits, one per time step.
    """
    T = int(input_seq.shape[0])
    H, C = hidden_size, char_size
    G4 = 4 * H                                  # packed gate width [f|i|o|g]
    CP = _round_up(C, 128)                      # lane-dense decoder output

    # --- JAX glue: pack weights, fold the one-hot projection into a gather ---
    def split(w):
        # PyTorch Linear weight is (out, in) with in = H + C and hx = cat(h, x).
        return w[:, :H].T, w[:, H:].T           # (H, H), (C, H)

    gate_names = ("f_gate", "i_gate", "o_gate", "cell_inp")   # [f | i | o | g]
    wh_parts, wx_parts, b_parts = [], [], []
    for name in gate_names:
        wh_g, wx_g = split(params[name + "_w"])
        wh_parts.append(wh_g)
        wx_parts.append(wx_g)
        b_parts.append(params[name + "_b"])
    wh = jnp.concatenate(wh_parts, axis=1)      # (H, 4H)
    wx = jnp.concatenate(wx_parts, axis=1)      # (C, 4H)
    b = jnp.concatenate(b_parts, axis=0)        # (4H,)

    # One-hot input => the x-projection is a row gather, hoisted out of the
    # serial recurrence entirely.
    xz = wx[input_seq] + b[None, :]             # (T, 4H) f32

    wd_pad = jnp.zeros((H, CP), jnp.float32).at[:, :C].set(
        params["decoder_w"].T)                  # (H, CP)
    bd_pad = jnp.zeros((1, CP), jnp.float32).at[0, :C].set(params["decoder_b"])

    wh_b = wh.astype(jnp.bfloat16)
    wd_b = wd_pad.astype(jnp.bfloat16)

    # Stream time in fixed-size chunks so VMEM stays bounded for long T.
    chunk = T if T <= max_chunk else max_chunk
    t_pad = _round_up(T, chunk)
    if t_pad != T:
        xz = jnp.pad(xz, ((0, t_pad - T), (0, 0)))
    num_chunks = t_pad // chunk

    kernel = functools.partial(_lstm_kernel, hidden=H, chunk=chunk,
                               unroll=min(chunk, 8))

    out_padded = pl.pallas_call(
        kernel,
        out_shape=jax.ShapeDtypeStruct((t_pad, CP), jnp.float32),
        grid=(num_chunks,),
        in_specs=[
            pl.BlockSpec((chunk, G4), lambda i: (i, 0)),    # xz  (streamed)
            pl.BlockSpec((H, G4), lambda i: (0, 0)),        # Wh  (resident)
            pl.BlockSpec((H, CP), lambda i: (0, 0)),        # Wd  (resident)
            pl.BlockSpec((1, CP), lambda i: (0, 0)),        # bd  (resident)
        ],
        out_specs=pl.BlockSpec((chunk, CP), lambda i: (i, 0)),
        scratch_shapes=[
            pltpu.VMEM((chunk, H), jnp.float32),            # h history (chunk)
            pltpu.VMEM((1, H), jnp.bfloat16),               # h carry
            pltpu.VMEM((1, H), jnp.float32),                # c carry
        ],
        compiler_params=pltpu.CompilerParams(
            dimension_semantics=("arbitrary",)),
    )(xz, wh_b, wd_b, bd_pad)

    return out_padded[:T, :C]


def init_params(key, char_size, hidden_size):
    """Deterministic init matching nn.init.uniform_(-k, k), k = 1/sqrt(H)."""
    H, C = hidden_size, char_size
    k = 1.0 / (H ** 0.5)
    names_shapes = [
        ("decoder_w", (C, H)), ("decoder_b", (C,)),
        ("cell_inp_w", (H, H + C)), ("cell_inp_b", (H,)),
        ("i_gate_w", (H, H + C)), ("i_gate_b", (H,)),
        ("f_gate_w", (H, H + C)), ("f_gate_b", (H,)),
        ("o_gate_w", (H, H + C)), ("o_gate_b", (H,)),
    ]
    params = {}
    keys = jax.random.split(key, len(names_shapes))
    for subkey, (name, shape) in zip(keys, names_shapes):
        params[name] = jax.random.uniform(
            subkey, shape, minval=-k, maxval=k, dtype=jnp.float32)
    return params


def reference_forward(input_seq, params, *, char_size, hidden_size):
    """Pure-JAX reference mirroring the PyTorch loop, for validation."""
    H, C = hidden_size, char_size
    xs = jax.nn.one_hot(input_seq, C, dtype=jnp.float32)
    h = jnp.zeros((H,), jnp.float32)
    c = jnp.zeros((H,), jnp.float32)

    def step(carry, x):
        h, c = carry
        hx = jnp.concatenate([h, x])
        f = jax.nn.sigmoid(params["f_gate_w"] @ hx + params["f_gate_b"])
        i = jax.nn.sigmoid(params["i_gate_w"] @ hx + params["i_gate_b"])
        o = jax.nn.sigmoid(params["o_gate_w"] @ hx + params["o_gate_b"])
        g = jnp.tanh(params["cell_inp_w"] @ hx + params["cell_inp_b"])
        c = f * c + i * g
        h = o * jnp.tanh(c)
        out = params["decoder_w"] @ h + params["decoder_b"]
        return (h, c), out

    _, outs = lax.scan(step, (h, c), xs)
    return outs


if __name__ == "__main__":
    char_size = 16
    hidden_size = 32
    seq_len = 8

    key = jax.random.PRNGKey(0)
    pkey, skey = jax.random.split(key)
    params = init_params(pkey, char_size, hidden_size)
    input_seq = jax.random.randint(skey, (seq_len,), 0, char_size, dtype=jnp.int32)

    out = custom_lstm_forward(
        input_seq, params, char_size=char_size, hidden_size=hidden_size)
    out = jax.block_until_ready(out)

    ref = reference_forward(
        input_seq, params, char_size=char_size, hidden_size=hidden_size)
    assert out.shape == (seq_len, char_size)
    # bf16 matmul weights / bf16 h feedback -> slightly looser tolerance.
    assert jnp.allclose(out, ref, atol=2e-2, rtol=2e-2), "mismatch vs reference"

    print("KERNEL_OK")
</pallas_src>

<mosaic_0001>
module attributes {stable_mosaic.version = 11 : i64} {
  func.func @_lstm_kernel(%arg0: i32, %arg1: memref<8x128xf32, #tpu.memory_space<vmem>>, %arg2: memref<32x128xbf16, #tpu.memory_space<vmem>>, %arg3: memref<32x128xbf16, #tpu.memory_space<vmem>>, %arg4: memref<1x128xf32, #tpu.memory_space<vmem>>, %arg5: memref<8x128xf32, #tpu.memory_space<vmem>>, %arg6: memref<8x32xf32, #tpu.memory_space<vmem>>, %arg7: memref<1x32xbf16, #tpu.memory_space<vmem>>, %arg8: memref<1x32xf32, #tpu.memory_space<vmem>>) attributes {dimension_semantics = [#tpu.dimension_semantics<arbitrary>], iteration_bounds = array<i64: 1>, scalar_prefetch = 0 : i64, scratch_operands = 3 : i64, tpu.core_type = #tpu.core_type<tc>, window_params = [{transform_indices = @transform_0, window_bounds = array<i64: 8, 128>}, {pipeline_mode = #tpu.pipeline_mode<synchronous>, transform_indices = @transform_1, window_bounds = array<i64: 32, 128>}, {pipeline_mode = #tpu.pipeline_mode<synchronous>, transform_indices = @transform_2, window_bounds = array<i64: 32, 128>}, {pipeline_mode = #tpu.pipeline_mode<synchronous>, transform_indices = @transform_3, window_bounds = array<i64: 1, 128>}, {transform_indices = @transform_4, window_bounds = array<i64: 8, 128>}]} {
    %c0_i32 = arith.constant 0 : i32
    %0 = arith.cmpi eq, %arg0, %c0_i32 : i32
    %1 = arith.extui %0 : i1 to i32
    %c0_i32_0 = arith.constant 0 : i32
    %2 = arith.cmpi ne, %1, %c0_i32_0 : i32
    scf.if %2 {
      %cst_75 = arith.constant 0.000000e+00 : bf16
      %205 = vector.broadcast %cst_75 : bf16 to vector<1x32xbf16>
      %c0_76 = arith.constant 0 : index
      %c0_77 = arith.constant 0 : index
      %206 = vector.load %arg7[%c0_76, %c0_77] : memref<1x32xbf16, #tpu.memory_space<vmem>>, vector<1x32xbf16>
      tpu.vector_store %arg7[%c0_76, %c0_77], %205 {strides = array<i32>} : memref<1x32xbf16, #tpu.memory_space<vmem>>, vector<1x32xbf16>,
      %cst_78 = arith.constant 0.000000e+00 : f32
      %207 = vector.broadcast %cst_78 : f32 to vector<1x32xf32>
      %c0_79 = arith.constant 0 : index
      %c0_80 = arith.constant 0 : index
      %208 = vector.load %arg8[%c0_79, %c0_80] : memref<1x32xf32, #tpu.memory_space<vmem>>, vector<1x32xf32>
      tpu.vector_store %arg8[%c0_79, %c0_80], %207 {strides = array<i32>} : memref<1x32xf32, #tpu.memory_space<vmem>>, vector<1x32xf32>,
    } else {
    }
    %3 = tpu.iota {dimensions = array<i32: 1>} : vector<1x128xi32>
    %c96_i32 = arith.constant 96 : i32
    %4 = vector.broadcast %c96_i32 : i32 to vector<1x128xi32>
    %5 = arith.cmpi slt, %3, %4 : vector<1x128xi32>
    %cst = arith.constant 5.000000e-01 : f32
    %cst_1 = arith.constant 1.000000e+00 : f32
    %6 = vector.broadcast %cst : f32 to vector<1x128xf32>
    %7 = vector.broadcast %cst_1 : f32 to vector<1x128xf32>
    %8 = arith.select %5, %6, %7 : vector<1x128xi1>, vector<1x128xf32>
    %c0 = arith.constant 0 : index
    %c0_2 = arith.constant 0 : index
    %9 = vector.load %arg7[%c0, %c0_2] : memref<1x32xbf16, #tpu.memory_space<vmem>>, vector<1x32xbf16>
    %c0_3 = arith.constant 0 : index
    %c0_4 = arith.constant 0 : index
    %10 = vector.load %arg8[%c0_3, %c0_4] : memref<1x32xf32, #tpu.memory_space<vmem>>, vector<1x32xf32>
    %c0_i32_5 = arith.constant 0 : i32
    %c0_6 = arith.constant 0 : index
    %c0_7 = arith.constant 0 : index
    %11 = vector.load %arg2[%c0_6, %c0_7] : memref<32x128xbf16, #tpu.memory_space<vmem>>, vector<32x128xbf16>
    %cst_8 = arith.constant dense<0.000000e+00> : vector<1x128xf32>
    %12 = tpu.matmul %9, %11, %cst_8 {dimension_numbers = #tpu.dot_dimension_numbers<[1], [0], [0], [1], [0, 0, 1, 1], [], []>} : vector<1x32xbf16>, vector<32x128xbf16>, vector<1x128xf32> -> vector<1x128xf32>
    %13 = arith.index_cast %c0_i32_5 : i32 to index
    %c0_9 = arith.constant 0 : index
    %14 = vector.load %arg1[%13, %c0_9] : memref<8x128xf32, #tpu.memory_space<vmem>>, vector<1x128xf32>
    %15 = arith.addf %12, %14 : vector<1x128xf32>
    %16 = arith.mulf %15, %8 : vector<1x128xf32>
    %17 = math.tanh %16 : vector<1x128xf32>
    %cst_10 = arith.constant 5.000000e-01 : f32
    %18 = vector.broadcast %cst_10 : f32 to vector<1x128xf32>
    %19 = arith.mulf %18, %17 : vector<1x128xf32>
    %cst_11 = arith.constant 5.000000e-01 : f32
    %20 = vector.broadcast %cst_11 : f32 to vector<1x128xf32>
    %21 = arith.addf %19, %20 : vector<1x128xf32>
    %22 = vector.extract_strided_slice %21 {offsets = [0, 0], sizes = [1, 32], strides = [1, 1]} : vector<1x128xf32> to vector<1x32xf32>
    %23 = vector.extract_strided_slice %21 {offsets = [0, 32], sizes = [1, 32], strides = [1, 1]} : vector<1x128xf32> to vector<1x32xf32>
    %24 = vector.extract_strided_slice %21 {offsets = [0, 64], sizes = [1, 32], strides = [1, 1]} : vector<1x128xf32> to vector<1x32xf32>
    %25 = vector.extract_strided_slice %17 {offsets = [0, 96], sizes = [1, 32], strides = [1, 1]} : vector<1x128xf32> to vector<1x32xf32>
    %26 = arith.mulf %22, %10 : vector<1x32xf32>
    %27 = arith.mulf %23, %25 : vector<1x32xf32>
    %28 = arith.addf %26, %27 : vector<1x32xf32>
    %29 = math.tanh %28 : vector<1x32xf32>
    %30 = arith.mulf %24, %29 : vector<1x32xf32>
    %31 = arith.truncf %30 : vector<1x32xf32> to vector<1x32xbf16>
    %32 = arith.index_cast %c0_i32_5 : i32 to index
    %c0_12 = arith.constant 0 : index
    %33 = vector.load %arg6[%32, %c0_12] : memref<8x32xf32, #tpu.memory_space<vmem>>, vector<1x32xf32>
    tpu.vector_store %arg6[%32, %c0_12], %30 {strides = array<i32>} : memref<8x32xf32, #tpu.memory_space<vmem>>, vector<1x32xf32>,
    %c1_i32 = arith.constant 1 : i32
    %c0_13 = arith.constant 0 : index
    %c0_14 = arith.constant 0 : index
    %34 = vector.load %arg2[%c0_13, %c0_14] : memref<32x128xbf16, #tpu.memory_space<vmem>>, vector<32x128xbf16>
    %cst_15 = arith.constant dense<0.000000e+00> : vector<1x128xf32>
    %35 = tpu.matmul %31, %34, %cst_15 {dimension_numbers = #tpu.dot_dimension_numbers<[1], [0], [0], [1], [0, 0, 1, 1], [], []>} : vector<1x32xbf16>, vector<32x128xbf16>, vector<1x128xf32> -> vector<1x128xf32>
    %36 = arith.index_cast %c1_i32 : i32 to index
    %c0_16 = arith.constant 0 : index
    %37 = vector.load %arg1[%36, %c0_16] : memref<8x128xf32, #tpu.memory_space<vmem>>, vector<1x128xf32>
    %38 = arith.addf %35, %37 : vector<1x128xf32>
    %39 = arith.mulf %38, %8 : vector<1x128xf32>
    %40 = math.tanh %39 : vector<1x128xf32>
    %cst_17 = arith.constant 5.000000e-01 : f32
    %41 = vector.broadcast %cst_17 : f32 to vector<1x128xf32>
    %42 = arith.mulf %41, %40 : vector<1x128xf32>
    %cst_18 = arith.constant 5.000000e-01 : f32
    %43 = vector.broadcast %cst_18 : f32 to vector<1x128xf32>
    %44 = arith.addf %42, %43 : vector<1x128xf32>
    %45 = vector.extract_strided_slice %44 {offsets = [0, 0], sizes = [1, 32], strides = [1, 1]} : vector<1x128xf32> to vector<1x32xf32>
    %46 = vector.extract_strided_slice %44 {offsets = [0, 32], sizes = [1, 32], strides = [1, 1]} : vector<1x128xf32> to vector<1x32xf32>
    %47 = vector.extract_strided_slice %44 {offsets = [0, 64], sizes = [1, 32], strides = [1, 1]} : vector<1x128xf32> to vector<1x32xf32>
    %48 = vector.extract_strided_slice %40 {offsets = [0, 96], sizes = [1, 32], strides = [1, 1]} : vector<1x128xf32> to vector<1x32xf32>
    %49 = arith.mulf %45, %28 : vector<1x32xf32>
    %50 = arith.mulf %46, %48 : vector<1x32xf32>
    %51 = arith.addf %49, %50 : vector<1x32xf32>
    %52 = math.tanh %51 : vector<1x32xf32>
    %53 = arith.mulf %47, %52 : vector<1x32xf32>
    %54 = arith.truncf %53 : vector<1x32xf32> to vector<1x32xbf16>
    %55 = arith.index_cast %c1_i32 : i32 to index
    %c0_19 = arith.constant 0 : index
    %56 = vector.load %arg6[%55, %c0_19] : memref<8x32xf32, #tpu.memory_space<vmem>>, vector<1x32xf32>
    tpu.vector_store %arg6[%55, %c0_19], %53 {strides = array<i32>} : memref<8x32xf32, #tpu.memory_space<vmem>>, vector<1x32xf32>,
    %c2_i32 = arith.constant 2 : i32
    %c0_20 = arith.constant 0 : index
    %c0_21 = arith.constant 0 : index
    %57 = vector.load %arg2[%c0_20, %c0_21] : memref<32x128xbf16, #tpu.memory_space<vmem>>, vector<32x128xbf16>
    %cst_22 = arith.constant dense<0.000000e+00> : vector<1x128xf32>
    %58 = tpu.matmul %54, %57, %cst_22 {dimension_numbers = #tpu.dot_dimension_numbers<[1], [0], [0], [1], [0, 0, 1, 1], [], []>} : vector<1x32xbf16>, vector<32x128xbf16>, vector<1x128xf32> -> vector<1x128xf32>
    %59 = arith.index_cast %c2_i32 : i32 to index
    %c0_23 = arith.constant 0 : index
    %60 = vector.load %arg1[%59, %c0_23] : memref<8x128xf32, #tpu.memory_space<vmem>>, vector<1x128xf32>
    %61 = arith.addf %58, %60 : vector<1x128xf32>
    %62 = arith.mulf %61, %8 : vector<1x128xf32>
    %63 = math.tanh %62 : vector<1x128xf32>
    %cst_24 = arith.constant 5.000000e-01 : f32
    %64 = vector.broadcast %cst_24 : f32 to vector<1x128xf32>
    %65 = arith.mulf %64, %63 : vector<1x128xf32>
    %cst_25 = arith.constant 5.000000e-01 : f32
    %66 = vector.broadcast %cst_25 : f32 to vector<1x128xf32>
    %67 = arith.addf %65, %66 : vector<1x128xf32>
    %68 = vector.extract_strided_slice %67 {offsets = [0, 0], sizes = [1, 32], strides = [1, 1]} : vector<1x128xf32> to vector<1x32xf32>
    %69 = vector.extract_strided_slice %67 {offsets = [0, 32], sizes = [1, 32], strides = [1, 1]} : vector<1x128xf32> to vector<1x32xf32>
    %70 = vector.extract_strided_slice %67 {offsets = [0, 64], sizes = [1, 32], strides = [1, 1]} : vector<1x128xf32> to vector<1x32xf32>
    %71 = vector.extract_strided_slice %63 {offsets = [0, 96], sizes = [1, 32], strides = [1, 1]} : vector<1x128xf32> to vector<1x32xf32>
    %72 = arith.mulf %68, %51 : vector<1x32xf32>
    %73 = arith.mulf %69, %71 : vector<1x32xf32>
    %74 = arith.addf %72, %73 : vector<1x32xf32>
    %75 = math.tanh %74 : vector<1x32xf32>
    %76 = arith.mulf %70, %75 : vector<1x32xf32>
    %77 = arith.truncf %76 : vector<1x32xf32> to vector<1x32xbf16>
    %78 = arith.index_cast %c2_i32 : i32 to index
    %c0_26 = arith.constant 0 : index
    %79 = vector.load %arg6[%78, %c0_26] : memref<8x32xf32, #tpu.memory_space<vmem>>, vector<1x32xf32>
    tpu.vector_store %arg6[%78, %c0_26], %76 {strides = array<i32>} : memref<8x32xf32, #tpu.memory_space<vmem>>, vector<1x32xf32>,
    %c3_i32 = arith.constant 3 : i32
    %c0_27 = arith.constant 0 : index
    %c0_28 = arith.constant 0 : index
    %80 = vector.load %arg2[%c0_27, %c0_28] : memref<32x128xbf16, #tpu.memory_space<vmem>>, vector<32x128xbf16>
    %cst_29 = arith.constant dense<0.000000e+00> : vector<1x128xf32>
    %81 = tpu.matmul %77, %80, %cst_29 {dimension_numbers = #tpu.dot_dimension_numbers<[1], [0], [0], [1], [0, 0, 1, 1], [], []>} : vector<1x32xbf16>, vector<32x128xbf16>, vector<1x128xf32> -> vector<1x128xf32>
    %82 = arith.index_cast %c3_i32 : i32 to index
    %c0_30 = arith.constant 0 : index
    %83 = vector.load %arg1[%82, %c0_30] : memref<8x128xf32, #tpu.memory_space<vmem>>, vector<1x128xf32>
    %84 = arith.addf %81, %83 : vector<1x128xf32>
    %85 = arith.mulf %84, %8 : vector<1x128xf32>
    %86 = math.tanh %85 : vector<1x128xf32>
    %cst_31 = arith.constant 5.000000e-01 : f32
    %87 = vector.broadcast %cst_31 : f32 to vector<1x128xf32>
    %88 = arith.mulf %87, %86 : vector<1x128xf32>
    %cst_32 = arith.constant 5.000000e-01 : f32
    %89 = vector.broadcast %cst_32 : f32 to vector<1x128xf32>
    %90 = arith.addf %88, %89 : vector<1x128xf32>
    %91 = vector.extract_strided_slice %90 {offsets = [0, 0], sizes = [1, 32], strides = [1, 1]} : vector<1x128xf32> to vector<1x32xf32>
    %92 = vector.extract_strided_slice %90 {offsets = [0, 32], sizes = [1, 32], strides = [1, 1]} : vector<1x128xf32> to vector<1x32xf32>
    %93 = vector.extract_strided_slice %90 {offsets = [0, 64], sizes = [1, 32], strides = [1, 1]} : vector<1x128xf32> to vector<1x32xf32>
    %94 = vector.extract_strided_slice %86 {offsets = [0, 96], sizes = [1, 32], strides = [1, 1]} : vector<1x128xf32> to vector<1x32xf32>
    %95 = arith.mulf %91, %74 : vector<1x32xf32>
    %96 = arith.mulf %92, %94 : vector<1x32xf32>
    %97 = arith.addf %95, %96 : vector<1x32xf32>
    %98 = math.tanh %97 : vector<1x32xf32>
    %99 = arith.mulf %93, %98 : vector<1x32xf32>
    %100 = arith.truncf %99 : vector<1x32xf32> to vector<1x32xbf16>
    %101 = arith.index_cast %c3_i32 : i32 to index
    %c0_33 = arith.constant 0 : index
    %102 = vector.load %arg6[%101, %c0_33] : memref<8x32xf32, #tpu.memory_space<vmem>>, vector<1x32xf32>
    tpu.vector_store %arg6[%101, %c0_33], %99 {strides = array<i32>} : memref<8x32xf32, #tpu.memory_space<vmem>>, vector<1x32xf32>,
    %c4_i32 = arith.constant 4 : i32
    %c0_34 = arith.constant 0 : index
    %c0_35 = arith.constant 0 : index
    %103 = vector.load %arg2[%c0_34, %c0_35] : memref<32x128xbf16, #tpu.memory_space<vmem>>, vector<32x128xbf16>
    %cst_36 = arith.constant dense<0.000000e+00> : vector<1x128xf32>
    %104 = tpu.matmul %100, %103, %cst_36 {dimension_numbers = #tpu.dot_dimension_numbers<[1], [0], [0], [1], [0, 0, 1, 1], [], []>} : vector<1x32xbf16>, vector<32x128xbf16>, vector<1x128xf32> -> vector<1x128xf32>
    %105 = arith.index_cast %c4_i32 : i32 to index
    %c0_37 = arith.constant 0 : index
    %106 = vector.load %arg1[%105, %c0_37] : memref<8x128xf32, #tpu.memory_space<vmem>>, vector<1x128xf32>
    %107 = arith.addf %104, %106 : vector<1x128xf32>
    %108 = arith.mulf %107, %8 : vector<1x128xf32>
    %109 = math.tanh %108 : vector<1x128xf32>
    %cst_38 = arith.constant 5.000000e-01 : f32
    %110 = vector.broadcast %cst_38 : f32 to vector<1x128xf32>
    %111 = arith.mulf %110, %109 : vector<1x128xf32>
    %cst_39 = arith.constant 5.000000e-01 : f32
    %112 = vector.broadcast %cst_39 : f32 to vector<1x128xf32>
    %113 = arith.addf %111, %112 : vector<1x128xf32>
    %114 = vector.extract_strided_slice %113 {offsets = [0, 0], sizes = [1, 32], strides = [1, 1]} : vector<1x128xf32> to vector<1x32xf32>
    %115 = vector.extract_strided_slice %113 {offsets = [0, 32], sizes = [1, 32], strides = [1, 1]} : vector<1x128xf32> to vector<1x32xf32>
    %116 = vector.extract_strided_slice %113 {offsets = [0, 64], sizes = [1, 32], strides = [1, 1]} : vector<1x128xf32> to vector<1x32xf32>
    %117 = vector.extract_strided_slice %109 {offsets = [0, 96], sizes = [1, 32], strides = [1, 1]} : vector<1x128xf32> to vector<1x32xf32>
    %118 = arith.mulf %114, %97 : vector<1x32xf32>
    %119 = arith.mulf %115, %117 : vector<1x32xf32>
    %120 = arith.addf %118, %119 : vector<1x32xf32>
    %121 = math.tanh %120 : vector<1x32xf32>
    %122 = arith.mulf %116, %121 : vector<1x32xf32>
    %123 = arith.truncf %122 : vector<1x32xf32> to vector<1x32xbf16>
    %124 = arith.index_cast %c4_i32 : i32 to index
    %c0_40 = arith.constant 0 : index
    %125 = vector.load %arg6[%124, %c0_40] : memref<8x32xf32, #tpu.memory_space<vmem>>, vector<1x32xf32>
    tpu.vector_store %arg6[%124, %c0_40], %122 {strides = array<i32>} : memref<8x32xf32, #tpu.memory_space<vmem>>, vector<1x32xf32>,
    %c5_i32 = arith.constant 5 : i32
    %c0_41 = arith.constant 0 : index
    %c0_42 = arith.constant 0 : index
    %126 = vector.load %arg2[%c0_41, %c0_42] : memref<32x128xbf16, #tpu.memory_space<vmem>>, vector<32x128xbf16>
    %cst_43 = arith.constant dense<0.000000e+00> : vector<1x128xf32>
    %127 = tpu.matmul %123, %126, %cst_43 {dimension_numbers = #tpu.dot_dimension_numbers<[1], [0], [0], [1], [0, 0, 1, 1], [], []>} : vector<1x32xbf16>, vector<32x128xbf16>, vector<1x128xf32> -> vector<1x128xf32>
    %128 = arith.index_cast %c5_i32 : i32 to index
    %c0_44 = arith.constant 0 : index
    %129 = vector.load %arg1[%128, %c0_44] : memref<8x128xf32, #tpu.memory_space<vmem>>, vector<1x128xf32>
    %130 = arith.addf %127, %129 : vector<1x128xf32>
    %131 = arith.mulf %130, %8 : vector<1x128xf32>
    %132 = math.tanh %131 : vector<1x128xf32>
    %cst_45 = arith.constant 5.000000e-01 : f32
    %133 = vector.broadcast %cst_45 : f32 to vector<1x128xf32>
    %134 = arith.mulf %133, %132 : vector<1x128xf32>
    %cst_46 = arith.constant 5.000000e-01 : f32
    %135 = vector.broadcast %cst_46 : f32 to vector<1x128xf32>
    %136 = arith.addf %134, %135 : vector<1x128xf32>
    %137 = vector.extract_strided_slice %136 {offsets = [0, 0], sizes = [1, 32], strides = [1, 1]} : vector<1x128xf32> to vector<1x32xf32>
    %138 = vector.extract_strided_slice %136 {offsets = [0, 32], sizes = [1, 32], strides = [1, 1]} : vector<1x128xf32> to vector<1x32xf32>
    %139 = vector.extract_strided_slice %136 {offsets = [0, 64], sizes = [1, 32], strides = [1, 1]} : vector<1x128xf32> to vector<1x32xf32>
    %140 = vector.extract_strided_slice %132 {offsets = [0, 96], sizes = [1, 32], strides = [1, 1]} : vector<1x128xf32> to vector<1x32xf32>
    %141 = arith.mulf %137, %120 : vector<1x32xf32>
    %142 = arith.mulf %138, %140 : vector<1x32xf32>
    %143 = arith.addf %141, %142 : vector<1x32xf32>
    %144 = math.tanh %143 : vector<1x32xf32>
    %145 = arith.mulf %139, %144 : vector<1x32xf32>
    %146 = arith.truncf %145 : vector<1x32xf32> to vector<1x32xbf16>
    %147 = arith.index_cast %c5_i32 : i32 to index
    %c0_47 = arith.constant 0 : index
    %148 = vector.load %arg6[%147, %c0_47] : memref<8x32xf32, #tpu.memory_space<vmem>>, vector<1x32xf32>
    tpu.vector_store %arg6[%147, %c0_47], %145 {strides = array<i32>} : memref<8x32xf32, #tpu.memory_space<vmem>>, vector<1x32xf32>,
    %c6_i32 = arith.constant 6 : i32
    %c0_48 = arith.constant 0 : index
    %c0_49 = arith.constant 0 : index
    %149 = vector.load %arg2[%c0_48, %c0_49] : memref<32x128xbf16, #tpu.memory_space<vmem>>, vector<32x128xbf16>
    %cst_50 = arith.constant dense<0.000000e+00> : vector<1x128xf32>
    %150 = tpu.matmul %146, %149, %cst_50 {dimension_numbers = #tpu.dot_dimension_numbers<[1], [0], [0], [1], [0, 0, 1, 1], [], []>} : vector<1x32xbf16>, vector<32x128xbf16>, vector<1x128xf32> -> vector<1x128xf32>
    %151 = arith.index_cast %c6_i32 : i32 to index
    %c0_51 = arith.constant 0 : index
    %152 = vector.load %arg1[%151, %c0_51] : memref<8x128xf32, #tpu.memory_space<vmem>>, vector<1x128xf32>
    %153 = arith.addf %150, %152 : vector<1x128xf32>
    %154 = arith.mulf %153, %8 : vector<1x128xf32>
    %155 = math.tanh %154 : vector<1x128xf32>
    %cst_52 = arith.constant 5.000000e-01 : f32
    %156 = vector.broadcast %cst_52 : f32 to vector<1x128xf32>
    %157 = arith.mulf %156, %155 : vector<1x128xf32>
    %cst_53 = arith.constant 5.000000e-01 : f32
    %158 = vector.broadcast %cst_53 : f32 to vector<1x128xf32>
    %159 = arith.addf %157, %158 : vector<1x128xf32>
    %160 = vector.extract_strided_slice %159 {offsets = [0, 0], sizes = [1, 32], strides = [1, 1]} : vector<1x128xf32> to vector<1x32xf32>
    %161 = vector.extract_strided_slice %159 {offsets = [0, 32], sizes = [1, 32], strides = [1, 1]} : vector<1x128xf32> to vector<1x32xf32>
    %162 = vector.extract_strided_slice %159 {offsets = [0, 64], sizes = [1, 32], strides = [1, 1]} : vector<1x128xf32> to vector<1x32xf32>
    %163 = vector.extract_strided_slice %155 {offsets = [0, 96], sizes = [1, 32], strides = [1, 1]} : vector<1x128xf32> to vector<1x32xf32>
    %164 = arith.mulf %160, %143 : vector<1x32xf32>
    %165 = arith.mulf %161, %163 : vector<1x32xf32>
    %166 = arith.addf %164, %165 : vector<1x32xf32>
    %167 = math.tanh %166 : vector<1x32xf32>
    %168 = arith.mulf %162, %167 : vector<1x32xf32>
    %169 = arith.truncf %168 : vector<1x32xf32> to vector<1x32xbf16>
    %170 = arith.index_cast %c6_i32 : i32 to index
    %c0_54 = arith.constant 0 : index
    %171 = vector.load %arg6[%170, %c0_54] : memref<8x32xf32, #tpu.memory_space<vmem>>, vector<1x32xf32>
    tpu.vector_store %arg6[%170, %c0_54], %168 {strides = array<i32>} : memref<8x32xf32, #tpu.memory_space<vmem>>, vector<1x32xf32>,
    %c7_i32 = arith.constant 7 : i32
    %c0_55 = arith.constant 0 : index
    %c0_56 = arith.constant 0 : index
    %172 = vector.load %arg2[%c0_55, %c0_56] : memref<32x128xbf16, #tpu.memory_space<vmem>>, vector<32x128xbf16>
    %cst_57 = arith.constant dense<0.000000e+00> : vector<1x128xf32>
    %173 = tpu.matmul %169, %172, %cst_57 {dimension_numbers = #tpu.dot_dimension_numbers<[1], [0], [0], [1], [0, 0, 1, 1], [], []>} : vector<1x32xbf16>, vector<32x128xbf16>, vector<1x128xf32> -> vector<1x128xf32>
    %174 = arith.index_cast %c7_i32 : i32 to index
    %c0_58 = arith.constant 0 : index
    %175 = vector.load %arg1[%174, %c0_58] : memref<8x128xf32, #tpu.memory_space<vmem>>, vector<1x128xf32>
    %176 = arith.addf %173, %175 : vector<1x128xf32>
    %177 = arith.mulf %176, %8 : vector<1x128xf32>
    %178 = math.tanh %177 : vector<1x128xf32>
    %cst_59 = arith.constant 5.000000e-01 : f32
    %179 = vector.broadcast %cst_59 : f32 to vector<1x128xf32>
    %180 = arith.mulf %179, %178 : vector<1x128xf32>
    %cst_60 = arith.constant 5.000000e-01 : f32
    %181 = vector.broadcast %cst_60 : f32 to vector<1x128xf32>
    %182 = arith.addf %180, %181 : vector<1x128xf32>
    %183 = vector.extract_strided_slice %182 {offsets = [0, 0], sizes = [1, 32], strides = [1, 1]} : vector<1x128xf32> to vector<1x32xf32>
    %184 = vector.extract_strided_slice %182 {offsets = [0, 32], sizes = [1, 32], strides = [1, 1]} : vector<1x128xf32> to vector<1x32xf32>
    %185 = vector.extract_strided_slice %182 {offsets = [0, 64], sizes = [1, 32], strides = [1, 1]} : vector<1x128xf32> to vector<1x32xf32>
    %186 = vector.extract_strided_slice %178 {offsets = [0, 96], sizes = [1, 32], strides = [1, 1]} : vector<1x128xf32> to vector<1x32xf32>
    %187 = arith.mulf %183, %166 : vector<1x32xf32>
    %188 = arith.mulf %184, %186 : vector<1x32xf32>
    %189 = arith.addf %187, %188 : vector<1x32xf32>
    %190 = math.tanh %189 : vector<1x32xf32>
    %191 = arith.mulf %185, %190 : vector<1x32xf32>
    %192 = arith.truncf %191 : vector<1x32xf32> to vector<1x32xbf16>
    %193 = arith.index_cast %c7_i32 : i32 to index
    %c0_61 = arith.constant 0 : index
    %194 = vector.load %arg6[%193, %c0_61] : memref<8x32xf32, #tpu.memory_space<vmem>>, vector<1x32xf32>
    tpu.vector_store %arg6[%193, %c0_61], %191 {strides = array<i32>} : memref<8x32xf32, #tpu.memory_space<vmem>>, vector<1x32xf32>,
    %c8_i32 = arith.constant 8 : i32
    %c0_62 = arith.constant 0 : index
    %c0_63 = arith.constant 0 : index
    %195 = vector.load %arg7[%c0_62, %c0_63] : memref<1x32xbf16, #tpu.memory_space<vmem>>, vector<1x32xbf16>
    tpu.vector_store %arg7[%c0_62, %c0_63], %192 {strides = array<i32>} : memref<1x32xbf16, #tpu.memory_space<vmem>>, vector<1x32xbf16>,
    %c0_64 = arith.constant 0 : index
    %c0_65 = arith.constant 0 : index
    %196 = vector.load %arg8[%c0_64, %c0_65] : memref<1x32xf32, #tpu.memory_space<vmem>>, vector<1x32xf32>
    tpu.vector_store %arg8[%c0_64, %c0_65], %189 {strides = array<i32>} : memref<1x32xf32, #tpu.memory_space<vmem>>, vector<1x32xf32>,
    %c0_66 = arith.constant 0 : index
    %c0_67 = arith.constant 0 : index
    %197 = vector.load %arg6[%c0_66, %c0_67] : memref<8x32xf32, #tpu.memory_space<vmem>>, vector<8x32xf32>
    %198 = arith.truncf %197 : vector<8x32xf32> to vector<8x32xbf16>
    %c0_68 = arith.constant 0 : index
    %c0_69 = arith.constant 0 : index
    %199 = vector.load %arg3[%c0_68, %c0_69] : memref<32x128xbf16, #tpu.memory_space<vmem>>, vector<32x128xbf16>
    %cst_70 = arith.constant dense<0.000000e+00> : vector<8x128xf32>
    %200 = tpu.matmul %198, %199, %cst_70 {dimension_numbers = #tpu.dot_dimension_numbers<[1], [0], [0], [1], [0, 0, 1, 1], [], []>} : vector<8x32xbf16>, vector<32x128xbf16>, vector<8x128xf32> -> vector<8x128xf32>
    %c0_71 = arith.constant 0 : index
    %c0_72 = arith.constant 0 : index
    %201 = vector.load %arg4[%c0_71, %c0_72] : memref<1x128xf32, #tpu.memory_space<vmem>>, vector<1x128xf32>
    %202 = vector.broadcast %201 : vector<1x128xf32> to vector<8x128xf32>
    %203 = arith.addf %200, %202 : vector<8x128xf32>
    %c0_73 = arith.constant 0 : index
    %c0_74 = arith.constant 0 : index
    %204 = vector.load %arg5[%c0_73, %c0_74] : memref<8x128xf32, #tpu.memory_space<vmem>>, vector<8x128xf32>
    tpu.vector_store %arg5[%c0_73, %c0_74], %203 {strides = array<i32>} : memref<8x128xf32, #tpu.memory_space<vmem>>, vector<8x128xf32>,
    return
  }
  func.func @transform_0(%arg0: i32) -> (i32, i32) {
    %c0_i32 = arith.constant 0 : i32
    %c0_i32_0 = arith.constant 0 : i32
    return %arg0, %c0_i32 : i32, i32
  }
  func.func @transform_1(%arg0: i32) -> (i32, i32) {
    %c0_i32 = arith.constant 0 : i32
    %c0_i32_0 = arith.constant 0 : i32
    %c0_i32_1 = arith.constant 0 : i32
    return %c0_i32, %c0_i32_0 : i32, i32
  }
  func.func @transform_2(%arg0: i32) -> (i32, i32) {
    %c0_i32 = arith.constant 0 : i32
    %c0_i32_0 = arith.constant 0 : i32
    %c0_i32_1 = arith.constant 0 : i32
    return %c0_i32, %c0_i32_0 : i32, i32
  }
  func.func @transform_3(%arg0: i32) -> (i32, i32) {
    %c0_i32 = arith.constant 0 : i32
    %c0_i32_0 = arith.constant 0 : i32
    %c0_i32_1 = arith.constant 0 : i32
    return %c0_i32, %c0_i32_0 : i32, i32
  }
  func.func @transform_4(%arg0: i32) -> (i32, i32) {
    %c0_i32 = arith.constant 0 : i32
    %c0_i32_0 = arith.constant 0 : i32
    return %arg0, %c0_i32 : i32, i32
  }
}

</mosaic_0001>

<llo_original>
// kernel: tpu_custom_call.1
$region0: #{tpu_custom_call.1}
  #allocation0 [shape = 'u32[]', space=smem, size = 0x4, offset = 0x4, fixed_abs, tag = 'smem constant byte address 0x4 - core index']
  #allocation1 [shape = 'u32[144,128]{1,0:T(1,128)}', space=vmem, size = 0x12000, scoped, tag = 'internal scratch']
  #allocation2 [shape = 'f32[8,32]{1,0:T(8,128)}', space=vmem, size = 0x1000, scoped, tag = 'scratch operand']
  #allocation3 [shape = 'bf16[1,32]{1,0:T(2,128)(2,1)}', space=vmem, size = 0x200, scoped, tag = 'scratch operand']
  #allocation4 [shape = 'f32[1,32]{1,0:T(1,128)}', space=vmem, size = 0x200, scoped, tag = 'scratch operand']
  %s0 = inlined_call_operand.hbm [shape: f32[8,128], index: 0, kind: input, shape index: {}]
  %s1 = inlined_call_operand.hbm [shape: bf16[32,128], index: 1, kind: input, shape index: {}]
  %s2 = inlined_call_operand.hbm [shape: bf16[32,128], index: 2, kind: input, shape index: {}]
  %s3 = inlined_call_operand.vmem [shape: f32[1,128], index: 3, kind: input, shape index: {}]
  %s4 = inlined_call_operand.hbm [shape: f32[8,128], index: 4, kind: output, shape index: {}]
  %s5 = sld [smem:[#allocation0]]
  $region42: #{tpu_custom_call.1} parent=0
    _
  %s7 = ssub.s32 1, %s5
  %s8 = scalar_select 0, %s7, %s5
  $region1: #{tpu_custom_call.1} parent=0
    #allocation5 [shape = 'u8[4096]{0}', space=vmem, size = 0x1000, scoped, tag = 'input window, operand 0, single buffered']
    #allocation6 [shape = 's32[1]{0}', space=sflag, size = 0x4, scoped, tag = 'scoped memory for tpu_custom_call.1']
    #allocation7 [shape = 's32[1]{0}', space=sflag, size = 0x4, scoped, tag = 'scoped memory for tpu_custom_call.1']
    #allocation8 [shape = 'u8[8192]{0}', space=vmem, size = 0x2000, scoped, tag = 'input window, operand 1, single buffered']
    #allocation9 [shape = 's32[1]{0}', space=sflag, size = 0x4, scoped, tag = 'scoped memory for tpu_custom_call.1']
    #allocation10 [shape = 'u8[8192]{0}', space=vmem, size = 0x2000, scoped, tag = 'input window, operand 2, single buffered']
    #allocation11 [shape = 'u8[4096]{0}', space=vmem, size = 0x1000, scoped, tag = 'output window, operand 0, single buffered']
    %9 = vsyncpa [#allocation6], 0
    %10 = vsyncpa [#allocation9], 0
    %11 = vsyncpa [#allocation7], 0
    // Predicated region
    $region2: #{tpu_custom_call.1} parent=1 // pred_check
      _
    $region3: #{tpu_custom_call.1} parent=1 // pred_check_branch
      %13 = sbr.rel (0) target = $region5
    $region4: #{tpu_custom_call.1} parent=1 // pred_region
      %s15 = ssub.s32 128, 128
      %16 = vsyncadd [#allocation6], %s15
      %s18 = sshll.u32 [#allocation5], 4
      %s19 = int_to_ptr.vmem [resolvable:$true] %s18
      %21 = dma.hbm_to_vmem [thread:$0]  %s0, 128, %s19, [#allocation6]
    $region5: #{tpu_custom_call.1} parent=1 // pred_fallthru
      _
    // Predicated region
    $region6: #{tpu_custom_call.1} parent=1 // pred_check
      _
    $region7: #{tpu_custom_call.1} parent=1 // pred_check_branch
      %23 = sbr.rel (0) target = $region9
    $region8: #{tpu_custom_call.1} parent=1 // pred_region
      %s25 = ssub.s32 256, 256
      %26 = vsyncadd [#allocation9], %s25
      %s27 = sshll.u32 [#allocation8], 4
      %s28 = int_to_ptr.vmem [resolvable:$true] %s27
      %33 = dma.hbm_to_vmem [thread:$0]  %s1, 256, %s28, [#allocation9], 64, 64, 4
    $region9: #{tpu_custom_call.1} parent=1 // pred_fallthru
      _
    // Predicated region
    $region10: #{tpu_custom_call.1} parent=1 // pred_check
      _
    $region11: #{tpu_custom_call.1} parent=1 // pred_check_branch
      %35 = sbr.rel (0) target = $region13
    $region12: #{tpu_custom_call.1} parent=1 // pred_region
      %s37 = ssub.s32 256, 256
      %38 = vsyncadd [#allocation9], %s37
      %s39 = sshll.u32 [#allocation10], 4
      %s40 = int_to_ptr.vmem [resolvable:$true] %s39
      %45 = dma.hbm_to_vmem [thread:$0]  %s2, 256, %s40, [#allocation9], 64, 64, 4
    $region13: #{tpu_custom_call.1} parent=1 // pred_fallthru
      _
    // Predicated region
    $region14: #{tpu_custom_call.1} parent=1 // pred_check
      _
    $region15: #{tpu_custom_call.1} parent=1 // pred_check_branch
      %47 = sbr.rel (0) target = $region17
    $region16: #{tpu_custom_call.1} parent=1 // pred_region
      _
    $region17: #{tpu_custom_call.1} parent=1 // pred_fallthru
      _
    // Predicated region
    $region18: #{tpu_custom_call.1} parent=1 // pred_check
      _
    $region19: #{tpu_custom_call.1} parent=1 // pred_check_branch
      %49 = sbr.rel (0) target = $region21
    $region20: #{tpu_custom_call.1} parent=1 // pred_region
      %50 = dma.done [#allocation6], 128
    $region21: #{tpu_custom_call.1} parent=1 // pred_fallthru
      _
    // Predicated region
    $region22: #{tpu_custom_call.1} parent=1 // pred_check
      _
    $region23: #{tpu_custom_call.1} parent=1 // pred_check_branch
      %52 = sbr.rel (0) target = $region25
    $region24: #{tpu_custom_call.1} parent=1 // pred_region
      %53 = dma.done [#allocation9], 256
    $region25: #{tpu_custom_call.1} parent=1 // pred_fallthru
      _
    // Predicated region
    $region26: #{tpu_custom_call.1} parent=1 // pred_check
      _
    $region27: #{tpu_custom_call.1} parent=1 // pred_check_branch
      %55 = sbr.rel (0) target = $region29
    $region28: #{tpu_custom_call.1} parent=1 // pred_region
      %56 = dma.done [#allocation9], 256
    $region29: #{tpu_custom_call.1} parent=1 // pred_fallthru
      _
    %p58 = scmp.eq.s32.totalorder 0, 0
    // Predicated region
    $region30: #{tpu_custom_call.1} parent=1 // pred_check
      %p59 = pneg %p58
    $region31: #{tpu_custom_call.1} parent=1 // pred_check_branch
      %61 = sbr.rel (%p59) target = $region33
    $region32: #{tpu_custom_call.1} parent=1 // pred_region
      %vm62 = vcmask 253952
      %vm63 = vsmask.f32 256
      %vm64 = vmand %vm62, %vm63
      %v65 = vld [vmem:[#allocation3] sm:$0x1]
      %v66 = vsel %vm64, 0, %v65
      %67 = vst [vmem:[#allocation3] sm:$0x1] %v66
      %vm68 = vcmask 253952
      %69 = vst.msk [vmem:[#allocation4] sm:$0x1] %vm68, 0.0
    $region33: #{tpu_custom_call.1} parent=1 // pred_fallthru
      _
    %v70 = vlaneseq
    %v71 = vand.u32 %v70, 127
    %vm72 = vcmp.lt.s32.totalorder %v71, 96
    %v73 = vsel %vm72, 0.5, 1.0
    %v74 = vld [vmem:[#allocation3] sm:$0x1]
    %v75 = vld [vmem:[#allocation4] sm:$0x1]
    %v76 = vld [vmem:[#allocation8] sm:$0xf]
    %v77 = vld [vmem:[#allocation8 + $0x4] sm:$0xf]
    %v78 = vld [vmem:[#allocation8 + $0x8] sm:$0xf]
    %v79 = vld [vmem:[#allocation8 + $0xc] sm:$0xf]
    %v80 = vld [vmem:[#allocation5] sm:$0x1]
    %v85 = vunpack.c.l.b16 %v76
    %v86 = vunpack.c.l.b16 %v77
    %v87 = vunpack.c.l.b16 %v78
    %v88 = vunpack.c.l.b16 %v79
    %v89 = vpack.c.b16 %v86, %v85
    %v90 = vpack.c.b16 %v88, %v87
    %vm93 = vcmask 261120
    %v95 = vsel %vm93, %v74, 0
    %97 = vmatprep.subr.bf16.mxu0 0
    %98 = vmatpush1.bf16.msra.mxu0 0
    %99 = vmatprep.subr.bf16.mxu0 0
    %100 = vmatpush1.bf16.msra.mxu0 0
    %101 = vmatprep.subr.bf16.mxu0 0
    %102 = vmatpush1.bf16.msra.mxu0 0
    %103 = vmatprep.subr.bf16.mxu0 0
    %104 = vmatpush1.bf16.msra.mxu0 0
    %105 = vmatprep.subr.bf16.mxu0 0
    %106 = vmatpush1.bf16.msra.mxu0 0
    %107 = vmatprep.subr.bf16.mxu0 0
    %108 = vmatpush1.bf16.msra.mxu0 0
    %109 = vmatprep.subr.bf16.mxu0 0
    %110 = vmatpush1.bf16.msra.mxu0 %v90
    %111 = vmatprep.subr.bf16.mxu0 0
    %112 = vmatpush1.bf16.msra.mxu0 %v89
    %113 = vmatprep.subr.bf16.mxu0 0
    %114 = vmatpush2.bf16.msra.mxu0 0
    %115 = vmatprep.subr.bf16.mxu0 0
    %116 = vmatpush2.bf16.msra.mxu0 0
    %117 = vmatprep.subr.bf16.mxu0 0
    %118 = vmatpush2.bf16.msra.mxu0 0
    %119 = vmatprep.subr.bf16.mxu0 0
    %120 = vmatpush2.bf16.msra.mxu0 0
    %121 = vmatprep.subr.bf16.mxu0 0
    %122 = vmatpush2.bf16.msra.mxu0 0
    %123 = vmatprep.subr.bf16.mxu0 0
    %124 = vmatpush2.bf16.msra.mxu0 0
    %125 = vmatprep.subr.bf16.mxu0 0
    %126 = vmatpush2.bf16.msra.mxu0 0
    %127 = vmatprep.subr.bf16.mxu0 0
    %128 = vmatpush2.bf16.msra.mxu0 0
    %129 = vmatprep.mubr.bf16.mxu0 0
    %130 = vmatmul.mubr.bf16.gmra.mxu0 %v95
    %v131 = vpop.f32.mrf.mxu0
    %v132 = vadd.f32 %v80, %v131
    %v133 = vpop.f32.mrf.mxu0
    %v134 = vpop.f32.mrf.mxu0
    %v135 = vpop.f32.mrf.mxu0
    %136 = vdwg.mxu0
    %v137 = vmul.f32 %v132, %v73
    %v138 = vtanh.pop %v137
    %v139 = vmul.f32 %v138, 0.5
    %v140 = vadd.f32 %v139, 0.5
    %v141 = vmul.f32 %v140, %v75
    %143 = vrot.lane.b32.xlu0 %v138, 64
    %v144 = vpop.permute.xlu0 %143
    %v146 = vmul.f32 %v140, %v144
    %148 = vrot.lane.b32.xlu0 %v146, 96
    %v149 = vpop.permute.xlu0 %148
    %v151 = vadd.f32 %v141, %v149
    %v152 = vtanh.pop %v151
    %154 = vrot.lane.b32.xlu0 %v152, 64
    %v155 = vpop.permute.xlu0 %154
    %v157 = vmul.f32 %v140, %v155
    %v158 = vpack.c.bf16 %v157, %v157
    %160 = vrot.lane.b32.xlu0 %v157, 64
    %v161 = vpop.permute.xlu0 %160
    %vm163 = vcmask 253952
    %164 = vst.msk [vmem:[#allocation2] sm:$0x1] %vm163, %v161
    %v165 = vld [vmem:[#allocation8] sm:$0xf]
    %v166 = vld [vmem:[#allocation8 + $0x4] sm:$0xf]
    %v167 = vld [vmem:[#allocation8 + $0x8] sm:$0xf]
    %v168 = vld [vmem:[#allocation8 + $0xc] sm:$0xf]
    %v169 = vld [vmem:[#allocation5 + $0x1] sm:$0x1]
    %171 = vrot.lane.b32.xlu0 %v158, 64
    %v172 = vpop.permute.xlu0 %171
    %v177 = vunpack.c.l.b16 %v165
    %v178 = vunpack.c.l.b16 %v166
    %v179 = vunpack.c.l.b16 %v167
    %v180 = vunpack.c.l.b16 %v168
    %v181 = vpack.c.b16 %v178, %v177
    %v182 = vpack.c.b16 %v180, %v179
    %v186 = vsel %vm93, %v172, 0
    %188 = vmatprep.subr.bf16.mxu0 0
    %189 = vmatpush1.bf16.msra.mxu0 0
    %190 = vmatprep.subr.bf16.mxu0 0
    %191 = vmatpush1.bf16.msra.mxu0 0
    %192 = vmatprep.subr.bf16.mxu0 0
    %193 = vmatpush1.bf16.msra.mxu0 0
    %194 = vmatprep.subr.bf16.mxu0 0
    %195 = vmatpush1.bf16.msra.mxu0 0
    %196 = vmatprep.subr.bf16.mxu0 0
    %197 = vmatpush1.bf16.msra.mxu0 0
    %198 = vmatprep.subr.bf16.mxu0 0
    %199 = vmatpush1.bf16.msra.mxu0 0
    %200 = vmatprep.subr.bf16.mxu0 0
    %201 = vmatpush1.bf16.msra.mxu0 %v182
    %202 = vmatprep.subr.bf16.mxu0 0
    %203 = vmatpush1.bf16.msra.mxu0 %v181
    %204 = vmatprep.subr.bf16.mxu0 0
    %205 = vmatpush2.bf16.msra.mxu0 0
    %206 = vmatprep.subr.bf16.mxu0 0
    %207 = vmatpush2.bf16.msra.mxu0 0
    %208 = vmatprep.subr.bf16.mxu0 0
    %209 = vmatpush2.bf16.msra.mxu0 0
    %210 = vmatprep.subr.bf16.mxu0 0
    %211 = vmatpush2.bf16.msra.mxu0 0
    %212 = vmatprep.subr.bf16.mxu0 0
    %213 = vmatpush2.bf16.msra.mxu0 0
    %214 = vmatprep.subr.bf16.mxu0 0
    %215 = vmatpush2.bf16.msra.mxu0 0
    %216 = vmatprep.subr.bf16.mxu0 0
    %217 = vmatpush2.bf16.msra.mxu0 0
    %218 = vmatprep.subr.bf16.mxu0 0
    %219 = vmatpush2.bf16.msra.mxu0 0
    %220 = vmatprep.mubr.bf16.mxu0 0
    %221 = vmatmul.mubr.bf16.gmra.mxu0 %v186
    %v222 = vpop.f32.mrf.mxu0
    %v223 = vadd.f32 %v169, %v222
    %v224 = vpop.f32.mrf.mxu0
    %v225 = vpop.f32.mrf.mxu0
    %v226 = vpop.f32.mrf.mxu0
    %227 = vdwg.mxu0
    %v228 = vmul.f32 %v223, %v73
    %v229 = vtanh.pop %v228
    %v230 = vmul.f32 %v229, 0.5
    %v231 = vadd.f32 %v230, 0.5
    %v232 = vmul.f32 %v231, %v151
    %234 = vrot.lane.b32.xlu0 %v229, 64
    %v235 = vpop.permute.xlu0 %234
    %v237 = vmul.f32 %v231, %v235
    %239 = vrot.lane.b32.xlu0 %v237, 96
    %v240 = vpop.permute.xlu0 %239
    %v242 = vadd.f32 %v232, %v240
    %v243 = vtanh.pop %v242
    %245 = vrot.lane.b32.xlu0 %v243, 64
    %v246 = vpop.permute.xlu0 %245
    %v248 = vmul.f32 %v231, %v246
    %v249 = vpack.c.bf16 %v248, %v248
    %251 = vrot.lane.b32.xlu0 %v248, 64
    %v252 = vpop.permute.xlu0 %251
    %254 = vst.msk [vmem:[#allocation2 + $0x1] sm:$0x1] %vm163, %v252
    %v255 = vld [vmem:[#allocation8] sm:$0xf]
    %v256 = vld [vmem:[#allocation8 + $0x4] sm:$0xf]
    %v257 = vld [vmem:[#allocation8 + $0x8] sm:$0xf]
    %v258 = vld [vmem:[#allocation8 + $0xc] sm:$0xf]
    %v259 = vld [vmem:[#allocation5 + $0x2] sm:$0x1]
    %261 = vrot.lane.b32.xlu0 %v249, 64
    %v262 = vpop.permute.xlu0 %261
    %v267 = vunpack.c.l.b16 %v255
    %v268 = vunpack.c.l.b16 %v256
    %v269 = vunpack.c.l.b16 %v257
    %v270 = vunpack.c.l.b16 %v258
    %v271 = vpack.c.b16 %v268, %v267
    %v272 = vpack.c.b16 %v270, %v269
    %v276 = vsel %vm93, %v262, 0
    %278 = vmatprep.subr.bf16.mxu0 0
    %279 = vmatpush1.bf16.msra.mxu0 0
    %280 = vmatprep.subr.bf16.mxu0 0
    %281 = vmatpush1.bf16.msra.mxu0 0
    %282 = vmatprep.subr.bf16.mxu0 0
    %283 = vmatpush1.bf16.msra.mxu0 0
    %284 = vmatprep.subr.bf16.mxu0 0
    %285 = vmatpush1.bf16.msra.mxu0 0
    %286 = vmatprep.subr.bf16.mxu0 0
    %287 = vmatpush1.bf16.msra.mxu0 0
    %288 = vmatprep.subr.bf16.mxu0 0
    %289 = vmatpush1.bf16.msra.mxu0 0
    %290 = vmatprep.subr.bf16.mxu0 0
    %291 = vmatpush1.bf16.msra.mxu0 %v272
    %292 = vmatprep.subr.bf16.mxu0 0
    %293 = vmatpush1.bf16.msra.mxu0 %v271
    %294 = vmatprep.subr.bf16.mxu0 0
    %295 = vmatpush2.bf16.msra.mxu0 0
    %296 = vmatprep.subr.bf16.mxu0 0
    %297 = vmatpush2.bf16.msra.mxu0 0
    %298 = vmatprep.subr.bf16.mxu0 0
    %299 = vmatpush2.bf16.msra.mxu0 0
    %300 = vmatprep.subr.bf16.mxu0 0
    %301 = vmatpush2.bf16.msra.mxu0 0
    %302 = vmatprep.subr.bf16.mxu0 0
    %303 = vmatpush2.bf16.msra.mxu0 0
    %304 = vmatprep.subr.bf16.mxu0 0
    %305 = vmatpush2.bf16.msra.mxu0 0
    %306 = vmatprep.subr.bf16.mxu0 0
    %307 = vmatpush2.bf16.msra.mxu0 0
    %308 = vmatprep.subr.bf16.mxu0 0
    %309 = vmatpush2.bf16.msra.mxu0 0
    %310 = vmatprep.mubr.bf16.mxu0 0
    %311 = vmatmul.mubr.bf16.gmra.mxu0 %v276
    %v312 = vpop.f32.mrf.mxu0
    %v313 = vadd.f32 %v259, %v312
    %v314 = vpop.f32.mrf.mxu0
    %v315 = vpop.f32.mrf.mxu0
    %v316 = vpop.f32.mrf.mxu0
    %317 = vdwg.mxu0
    %v318 = vmul.f32 %v313, %v73
    %v319 = vtanh.pop %v318
    %v320 = vmul.f32 %v319, 0.5
    %v321 = vadd.f32 %v320, 0.5
    %v322 = vmul.f32 %v321, %v242
    %324 = vrot.lane.b32.xlu0 %v319, 64
    %v325 = vpop.permute.xlu0 %324
    %v327 = vmul.f32 %v321, %v325
    %329 = vrot.lane.b32.xlu0 %v327, 96
    %v330 = vpop.permute.xlu0 %329
    %v332 = vadd.f32 %v322, %v330
    %v333 = vtanh.pop %v332
    %335 = vrot.lane.b32.xlu0 %v333, 64
    %v336 = vpop.permute.xlu0 %335
    %v338 = vmul.f32 %v321, %v336
    %v339 = vpack.c.bf16 %v338, %v338
    %341 = vrot.lane.b32.xlu0 %v338, 64
    %v342 = vpop.permute.xlu0 %341
    %344 = vst.msk [vmem:[#allocation2 + $0x2] sm:$0x1] %vm163, %v342
    %v345 = vld [vmem:[#allocation8] sm:$0xf]
    %v346 = vld [vmem:[#allocation8 + $0x4] sm:$0xf]
    %v347 = vld [vmem:[#allocation8 + $0x8] sm:$0xf]
    %v348 = vld [vmem:[#allocation8 + $0xc] sm:$0xf]
    %v349 = vld [vmem:[#allocation5 + $0x3] sm:$0x1]
    %351 = vrot.lane.b32.xlu0 %v339, 64
    %v352 = vpop.permute.xlu0 %351
    %v357 = vunpack.c.l.b16 %v345
    %v358 = vunpack.c.l.b16 %v346
    %v359 = vunpack.c.l.b16 %v347
    %v360 = vunpack.c.l.b16 %v348
    %v361 = vpack.c.b16 %v358, %v357
    %v362 = vpack.c.b16 %v360, %v359
    %v366 = vsel %vm93, %v352, 0
    %368 = vmatprep.subr.bf16.mxu0 0
    %369 = vmatpush1.bf16.msra.mxu0 0
    %370 = vmatprep.subr.bf16.mxu0 0
    %371 = vmatpush1.bf16.msra.mxu0 0
    %372 = vmatprep.subr.bf16.mxu0 0
    %373 = vmatpush1.bf16.msra.mxu0 0
    %374 = vmatprep.subr.bf16.mxu0 0
    %375 = vmatpush1.bf16.msra.mxu0 0
    %376 = vmatprep.subr.bf16.mxu0 0
    %377 = vmatpush1.bf16.msra.mxu0 0
    %378 = vmatprep.subr.bf16.mxu0 0
    %379 = vmatpush1.bf16.msra.mxu0 0
    %380 = vmatprep.subr.bf16.mxu0 0
    %381 = vmatpush1.bf16.msra.mxu0 %v362
    %382 = vmatprep.subr.bf16.mxu0 0
    %383 = vmatpush1.bf16.msra.mxu0 %v361
    %384 = vmatprep.subr.bf16.mxu0 0
    %385 = vmatpush2.bf16.msra.mxu0 0
    %386 = vmatprep.subr.bf16.mxu0 0
    %387 = vmatpush2.bf16.msra.mxu0 0
    %388 = vmatprep.subr.bf16.mxu0 0
    %389 = vmatpush2.bf16.msra.mxu0 0
    %390 = vmatprep.subr.bf16.mxu0 0
    %391 = vmatpush2.bf16.msra.mxu0 0
    %392 = vmatprep.subr.bf16.mxu0 0
    %393 = vmatpush2.bf16.msra.mxu0 0
    %394 = vmatprep.subr.bf16.mxu0 0
    %395 = vmatpush2.bf16.msra.mxu0 0
    %396 = vmatprep.subr.bf16.mxu0 0
    %397 = vmatpush2.bf16.msra.mxu0 0
    %398 = vmatprep.subr.bf16.mxu0 0
    %399 = vmatpush2.bf16.msra.mxu0 0
    %400 = vmatprep.mubr.bf16.mxu0 0
    %401 = vmatmul.mubr.bf16.gmra.mxu0 %v366
    %v402 = vpop.f32.mrf.mxu0
    %v403 = vadd.f32 %v349, %v402
    %v404 = vpop.f32.mrf.mxu0
    %v405 = vpop.f32.mrf.mxu0
    %v406 = vpop.f32.mrf.mxu0
    %407 = vdwg.mxu0
    %v408 = vmul.f32 %v403, %v73
    %v409 = vtanh.pop %v408
    %v410 = vmul.f32 %v409, 0.5
    %v411 = vadd.f32 %v410, 0.5
    %v412 = vmul.f32 %v411, %v332
    %414 = vrot.lane.b32.xlu0 %v409, 64
    %v415 = vpop.permute.xlu0 %414
    %v417 = vmul.f32 %v411, %v415
    %419 = vrot.lane.b32.xlu0 %v417, 96
    %v420 = vpop.permute.xlu0 %419
    %v422 = vadd.f32 %v412, %v420
    %v423 = vtanh.pop %v422
    %425 = vrot.lane.b32.xlu0 %v423, 64
    %v426 = vpop.permute.xlu0 %425
    %v428 = vmul.f32 %v411, %v426
    %v429 = vpack.c.bf16 %v428, %v428
    %431 = vrot.lane.b32.xlu0 %v428, 64
    %v432 = vpop.permute.xlu0 %431
    %434 = vst.msk [vmem:[#allocation2 + $0x3] sm:$0x1] %vm163, %v432
    %v435 = vld [vmem:[#allocation8] sm:$0xf]
    %v436 = vld [vmem:[#allocation8 + $0x4] sm:$0xf]
    %v437 = vld [vmem:[#allocation8 + $0x8] sm:$0xf]
    %v438 = vld [vmem:[#allocation8 + $0xc] sm:$0xf]
    %v439 = vld [vmem:[#allocation5 + $0x4] sm:$0x1]
    %441 = vrot.lane.b32.xlu0 %v429, 64
    %v442 = vpop.permute.xlu0 %441
    %v447 = vunpack.c.l.b16 %v435
    %v448 = vunpack.c.l.b16 %v436
    %v449 = vunpack.c.l.b16 %v437
    %v450 = vunpack.c.l.b16 %v438
    %v451 = vpack.c.b16 %v448, %v447
    %v452 = vpack.c.b16 %v450, %v449
    %v456 = vsel %vm93, %v442, 0
    %458 = vmatprep.subr.bf16.mxu0 0
    %459 = vmatpush1.bf16.msra.mxu0 0
    %460 = vmatprep.subr.bf16.mxu0 0
    %461 = vmatpush1.bf16.msra.mxu0 0
    %462 = vmatprep.subr.bf16.mxu0 0
    %463 = vmatpush1.bf16.msra.mxu0 0
    %464 = vmatprep.subr.bf16.mxu0 0
    %465 = vmatpush1.bf16.msra.mxu0 0
    %466 = vmatprep.subr.bf16.mxu0 0
    %467 = vmatpush1.bf16.msra.mxu0 0
    %468 = vmatprep.subr.bf16.mxu0 0
    %469 = vmatpush1.bf16.msra.mxu0 0
    %470 = vmatprep.subr.bf16.mxu0 0
    %471 = vmatpush1.bf16.msra.mxu0 %v452
    %472 = vmatprep.subr.bf16.mxu0 0
    %473 = vmatpush1.bf16.msra.mxu0 %v451
    %474 = vmatprep.subr.bf16.mxu0 0
    %475 = vmatpush2.bf16.msra.mxu0 0
    %476 = vmatprep.subr.bf16.mxu0 0
    %477 = vmatpush2.bf16.msra.mxu0 0
    %478 = vmatprep.subr.bf16.mxu0 0
    %479 = vmatpush2.bf16.msra.mxu0 0
    %480 = vmatprep.subr.bf16.mxu0 0
    %481 = vmatpush2.bf16.msra.mxu0 0
    %482 = vmatprep.subr.bf16.mxu0 0
    %483 = vmatpush2.bf16.msra.mxu0 0
    %484 = vmatprep.subr.bf16.mxu0 0
    %485 = vmatpush2.bf16.msra.mxu0 0
    %486 = vmatprep.subr.bf16.mxu0 0
    %487 = vmatpush2.bf16.msra.mxu0 0
    %488 = vmatprep.subr.bf16.mxu0 0
    %489 = vmatpush2.bf16.msra.mxu0 0
    %490 = vmatprep.mubr.bf16.mxu0 0
    %491 = vmatmul.mubr.bf16.gmra.mxu0 %v456
    %v492 = vpop.f32.mrf.mxu0
    %v493 = vadd.f32 %v439, %v492
    %v494 = vpop.f32.mrf.mxu0
    %v495 = vpop.f32.mrf.mxu0
    %v496 = vpop.f32.mrf.mxu0
    %497 = vdwg.mxu0
    %v498 = vmul.f32 %v493, %v73
    %v499 = vtanh.pop %v498
    %v500 = vmul.f32 %v499, 0.5
    %v501 = vadd.f32 %v500, 0.5
    %v502 = vmul.f32 %v501, %v422
    %504 = vrot.lane.b32.xlu0 %v499, 64
    %v505 = vpop.permute.xlu0 %504
    %v507 = vmul.f32 %v501, %v505
    %509 = vrot.lane.b32.xlu0 %v507, 96
    %v510 = vpop.permute.xlu0 %509
    %v512 = vadd.f32 %v502, %v510
    %v513 = vtanh.pop %v512
    %515 = vrot.lane.b32.xlu0 %v513, 64
    %v516 = vpop.permute.xlu0 %515
    %v518 = vmul.f32 %v501, %v516
    %v519 = vpack.c.bf16 %v518, %v518
    %521 = vrot.lane.b32.xlu0 %v518, 64
    %v522 = vpop.permute.xlu0 %521
    %524 = vst.msk [vmem:[#allocation2 + $0x4] sm:$0x1] %vm163, %v522
    %v525 = vld [vmem:[#allocation8] sm:$0xf]
    %v526 = vld [vmem:[#allocation8 + $0x4] sm:$0xf]
    %v527 = vld [vmem:[#allocation8 + $0x8] sm:$0xf]
    %v528 = vld [vmem:[#allocation8 + $0xc] sm:$0xf]
    %v529 = vld [vmem:[#allocation5 + $0x5] sm:$0x1]
    %531 = vrot.lane.b32.xlu0 %v519, 64
    %v532 = vpop.permute.xlu0 %531
    %v537 = vunpack.c.l.b16 %v525
    %v538 = vunpack.c.l.b16 %v526
    %v539 = vunpack.c.l.b16 %v527
    %v540 = vunpack.c.l.b16 %v528
    %v541 = vpack.c.b16 %v538, %v537
    %v542 = vpack.c.b16 %v540, %v539
    %v546 = vsel %vm93, %v532, 0
    %548 = vmatprep.subr.bf16.mxu0 0
    %549 = vmatpush1.bf16.msra.mxu0 0
    %550 = vmatprep.subr.bf16.mxu0 0
    %551 = vmatpush1.bf16.msra.mxu0 0
    %552 = vmatprep.subr.bf16.mxu0 0
    %553 = vmatpush1.bf16.msra.mxu0 0
    %554 = vmatprep.subr.bf16.mxu0 0
    %555 = vmatpush1.bf16.msra.mxu0 0
    %556 = vmatprep.subr.bf16.mxu0 0
    %557 = vmatpush1.bf16.msra.mxu0 0
    %558 = vmatprep.subr.bf16.mxu0 0
    %559 = vmatpush1.bf16.msra.mxu0 0
    %560 = vmatprep.subr.bf16.mxu0 0
    %561 = vmatpush1.bf16.msra.mxu0 %v542
    %562 = vmatprep.subr.bf16.mxu0 0
    %563 = vmatpush1.bf16.msra.mxu0 %v541
    %564 = vmatprep.subr.bf16.mxu0 0
    %565 = vmatpush2.bf16.msra.mxu0 0
    %566 = vmatprep.subr.bf16.mxu0 0
    %567 = vmatpush2.bf16.msra.mxu0 0
    %568 = vmatprep.subr.bf16.mxu0 0
    %569 = vmatpush2.bf16.msra.mxu0 0
    %570 = vmatprep.subr.bf16.mxu0 0
    %571 = vmatpush2.bf16.msra.mxu0 0
    %572 = vmatprep.subr.bf16.mxu0 0
    %573 = vmatpush2.bf16.msra.mxu0 0
    %574 = vmatprep.subr.bf16.mxu0 0
    %575 = vmatpush2.bf16.msra.mxu0 0
    %576 = vmatprep.subr.bf16.mxu0 0
    %577 = vmatpush2.bf16.msra.mxu0 0
    %578 = vmatprep.subr.bf16.mxu0 0
    %579 = vmatpush2.bf16.msra.mxu0 0
    %580 = vmatprep.mubr.bf16.mxu0 0
    %581 = vmatmul.mubr.bf16.gmra.mxu0 %v546
    %v582 = vpop.f32.mrf.mxu0
    %v583 = vadd.f32 %v529, %v582
    %v584 = vpop.f32.mrf.mxu0
    %v585 = vpop.f32.mrf.mxu0
    %v586 = vpop.f32.mrf.mxu0
    %587 = vdwg.mxu0
    %v588 = vmul.f32 %v583, %v73
    %v589 = vtanh.pop %v588
    %v590 = vmul.f32 %v589, 0.5
    %v591 = vadd.f32 %v590, 0.5
    %v592 = vmul.f32 %v591, %v512
    %594 = vrot.lane.b32.xlu0 %v589, 64
    %v595 = vpop.permute.xlu0 %594
    %v597 = vmul.f32 %v591, %v595
    %599 = vrot.lane.b32.xlu0 %v597, 96
    %v600 = vpop.permute.xlu0 %599
    %v602 = vadd.f32 %v592, %v600
    %v603 = vtanh.pop %v602
    %605 = vrot.lane.b32.xlu0 %v603, 64
    %v606 = vpop.permute.xlu0 %605
    %v608 = vmul.f32 %v591, %v606
    %v609 = vpack.c.bf16 %v608, %v608
    %611 = vrot.lane.b32.xlu0 %v608, 64
    %v612 = vpop.permute.xlu0 %611
    %614 = vst.msk [vmem:[#allocation2 + $0x5] sm:$0x1] %vm163, %v612
    %v615 = vld [vmem:[#allocation8] sm:$0xf]
    %v616 = vld [vmem:[#allocation8 + $0x4] sm:$0xf]
    %v617 = vld [vmem:[#allocation8 + $0x8] sm:$0xf]
    %v618 = vld [vmem:[#allocation8 + $0xc] sm:$0xf]
    %v619 = vld [vmem:[#allocation5 + $0x6] sm:$0x1]
    %621 = vrot.lane.b32.xlu0 %v609, 64
    %v622 = vpop.permute.xlu0 %621
    %v627 = vunpack.c.l.b16 %v615
    %v628 = vunpack.c.l.b16 %v616
    %v629 = vunpack.c.l.b16 %v617
    %v630 = vunpack.c.l.b16 %v618
    %v631 = vpack.c.b16 %v628, %v627
    %v632 = vpack.c.b16 %v630, %v629
    %v636 = vsel %vm93, %v622, 0
    %638 = vmatprep.subr.bf16.mxu0 0
    %639 = vmatpush1.bf16.msra.mxu0 0
    %640 = vmatprep.subr.bf16.mxu0 0
    %641 = vmatpush1.bf16.msra.mxu0 0
    %642 = vmatprep.subr.bf16.mxu0 0
    %643 = vmatpush1.bf16.msra.mxu0 0
    %644 = vmatprep.subr.bf16.mxu0 0
    %645 = vmatpush1.bf16.msra.mxu0 0
    %646 = vmatprep.subr.bf16.mxu0 0
    %647 = vmatpush1.bf16.msra.mxu0 0
    %648 = vmatprep.subr.bf16.mxu0 0
    %649 = vmatpush1.bf16.msra.mxu0 0
    %650 = vmatprep.subr.bf16.mxu0 0
    %651 = vmatpush1.bf16.msra.mxu0 %v632
    %652 = vmatprep.subr.bf16.mxu0 0
    %653 = vmatpush1.bf16.msra.mxu0 %v631
    %654 = vmatprep.subr.bf16.mxu0 0
    %655 = vmatpush2.bf16.msra.mxu0 0
    %656 = vmatprep.subr.bf16.mxu0 0
    %657 = vmatpush2.bf16.msra.mxu0 0
    %658 = vmatprep.subr.bf16.mxu0 0
    %659 = vmatpush2.bf16.msra.mxu0 0
    %660 = vmatprep.subr.bf16.mxu0 0
    %661 = vmatpush2.bf16.msra.mxu0 0
    %662 = vmatprep.subr.bf16.mxu0 0
    %663 = vmatpush2.bf16.msra.mxu0 0
    %664 = vmatprep.subr.bf16.mxu0 0
    %665 = vmatpush2.bf16.msra.mxu0 0
    %666 = vmatprep.subr.bf16.mxu0 0
    %667 = vmatpush2.bf16.msra.mxu0 0
    %668 = vmatprep.subr.bf16.mxu0 0
    %669 = vmatpush2.bf16.msra.mxu0 0
    %670 = vmatprep.mubr.bf16.mxu0 0
    %671 = vmatmul.mubr.bf16.gmra.mxu0 %v636
    %v672 = vpop.f32.mrf.mxu0
    %v673 = vadd.f32 %v619, %v672
    %v674 = vpop.f32.mrf.mxu0
    %v675 = vpop.f32.mrf.mxu0
    %v676 = vpop.f32.mrf.mxu0
    %677 = vdwg.mxu0
    %v678 = vmul.f32 %v673, %v73
    %v679 = vtanh.pop %v678
    %v680 = vmul.f32 %v679, 0.5
    %v681 = vadd.f32 %v680, 0.5
    %v682 = vmul.f32 %v681, %v602
    %684 = vrot.lane.b32.xlu0 %v679, 64
    %v685 = vpop.permute.xlu0 %684
    %v687 = vmul.f32 %v681, %v685
    %689 = vrot.lane.b32.xlu0 %v687, 96
    %v690 = vpop.permute.xlu0 %689
    %v692 = vadd.f32 %v682, %v690
    %v693 = vtanh.pop %v692
    %695 = vrot.lane.b32.xlu0 %v693, 64
    %v696 = vpop.permute.xlu0 %695
    %v698 = vmul.f32 %v681, %v696
    %v699 = vpack.c.bf16 %v698, %v698
    %701 = vrot.lane.b32.xlu0 %v698, 64
    %v702 = vpop.permute.xlu0 %701
    %704 = vst.msk [vmem:[#allocation2 + $0x6] sm:$0x1] %vm163, %v702
    %v705 = vld [vmem:[#allocation8] sm:$0xf]
    %v706 = vld [vmem:[#allocation8 + $0x4] sm:$0xf]
    %v707 = vld [vmem:[#allocation8 + $0x8] sm:$0xf]
    %v708 = vld [vmem:[#allocation8 + $0xc] sm:$0xf]
    %v709 = vld [vmem:[#allocation5 + $0x7] sm:$0x1]
    %711 = vrot.lane.b32.xlu0 %v699, 64
    %v712 = vpop.permute.xlu0 %711
    %v717 = vunpack.c.l.b16 %v705
    %v718 = vunpack.c.l.b16 %v706
    %v719 = vunpack.c.l.b16 %v707
    %v720 = vunpack.c.l.b16 %v708
    %v721 = vpack.c.b16 %v718, %v717
    %v722 = vpack.c.b16 %v720, %v719
    %v726 = vsel %vm93, %v712, 0
    %728 = vmatprep.subr.bf16.mxu0 0
    %729 = vmatpush1.bf16.msra.mxu0 0
    %730 = vmatprep.subr.bf16.mxu0 0
    %731 = vmatpush1.bf16.msra.mxu0 0
    %732 = vmatprep.subr.bf16.mxu0 0
    %733 = vmatpush1.bf16.msra.mxu0 0
    %734 = vmatprep.subr.bf16.mxu0 0
    %735 = vmatpush1.bf16.msra.mxu0 0
    %736 = vmatprep.subr.bf16.mxu0 0
    %737 = vmatpush1.bf16.msra.mxu0 0
    %738 = vmatprep.subr.bf16.mxu0 0
    %739 = vmatpush1.bf16.msra.mxu0 0
    %740 = vmatprep.subr.bf16.mxu0 0
    %741 = vmatpush1.bf16.msra.mxu0 %v722
    %742 = vmatprep.subr.bf16.mxu0 0
    %743 = vmatpush1.bf16.msra.mxu0 %v721
    %744 = vmatprep.subr.bf16.mxu0 0
    %745 = vmatpush2.bf16.msra.mxu0 0
    %746 = vmatprep.subr.bf16.mxu0 0
    %747 = vmatpush2.bf16.msra.mxu0 0
    %748 = vmatprep.subr.bf16.mxu0 0
    %749 = vmatpush2.bf16.msra.mxu0 0
    %750 = vmatprep.subr.bf16.mxu0 0
    %751 = vmatpush2.bf16.msra.mxu0 0
    %752 = vmatprep.subr.bf16.mxu0 0
    %753 = vmatpush2.bf16.msra.mxu0 0
    %754 = vmatprep.subr.bf16.mxu0 0
    %755 = vmatpush2.bf16.msra.mxu0 0
    %756 = vmatprep.subr.bf16.mxu0 0
    %757 = vmatpush2.bf16.msra.mxu0 0
    %758 = vmatprep.subr.bf16.mxu0 0
    %759 = vmatpush2.bf16.msra.mxu0 0
    %760 = vmatprep.mubr.bf16.mxu0 0
    %761 = vmatmul.mubr.bf16.gmra.mxu0 %v726
    %v762 = vpop.f32.mrf.mxu0
    %v763 = vadd.f32 %v709, %v762
    %v764 = vpop.f32.mrf.mxu0
    %v765 = vpop.f32.mrf.mxu0
    %v766 = vpop.f32.mrf.mxu0
    %767 = vdwg.mxu0
    %v768 = vmul.f32 %v763, %v73
    %v769 = vtanh.pop %v768
    %v770 = vmul.f32 %v769, 0.5
    %v771 = vadd.f32 %v770, 0.5
    %v772 = vmul.f32 %v771, %v692
    %774 = vrot.lane.b32.xlu0 %v769, 64
    %v775 = vpop.permute.xlu0 %774
    %v777 = vmul.f32 %v771, %v775
    %779 = vrot.lane.b32.xlu0 %v777, 96
    %v780 = vpop.permute.xlu0 %779
    %v782 = vadd.f32 %v772, %v780
    %v783 = vtanh.pop %v782
    %785 = vrot.lane.b32.xlu0 %v783, 64
    %v786 = vpop.permute.xlu0 %785
    %v788 = vmul.f32 %v771, %v786
    %v789 = vpack.c.bf16 %v788, %v788
    %791 = vrot.lane.b32.xlu0 %v788, 64
    %v792 = vpop.permute.xlu0 %791
    %794 = vst.msk [vmem:[#allocation2 + $0x7] sm:$0x1] %vm163, %v792
    %v797 = vunpack.c.l.s4 1966171168
    %v798 = vunpack.c.0.s8 %v797
    %v799 = vlaneseq
    %v800 = vshrl.u32 %v799, 7
    %v801 = vsub.s32 %v798, %v800
    %v802 = vrot.slane %v789, %v801
    %v804 = vunpack.c.l.s4 1966171168
    %v805 = vunpack.c.0.s8 %v804
    %v806 = vlaneseq
    %v807 = vshrl.u32 %v806, 7
    %v808 = vsub.s32 %v805, %v807
    %v809 = vrot.slane %v802, %v808
    %810 = vrot.lane.b32.xlu0 %v809, 64
    %v811 = vpop.permute.xlu0 %810
    %vm813 = vcmask 253952
    %vm814 = vsmask.f32 256
    %vm815 = vmand %vm813, %vm814
    %v816 = vld [vmem:[#allocation3] sm:$0x1]
    %v817 = vsel %vm815, %v811, %v816
    %818 = vst [vmem:[#allocation3] sm:$0x1] %v817
    %819 = vst.msk [vmem:[#allocation4] sm:$0x1] %vm163, %v782
    %v820 = vld [vmem:[#allocation2] sm:$0xff]
    %v821 = vpack.c.bf16 %v820, %v820
    %v822 = vld [vmem:[#allocation10] sm:$0xf]
    %v823 = vld [vmem:[#allocation10 + $0x4] sm:$0xf]
    %v824 = vld [vmem:[#allocation10 + $0x8] sm:$0xf]
    %v825 = vld [vmem:[#allocation10 + $0xc] sm:$0xf]
    %v826 = vld [vmem:[%s3] sm:$0x1]
    %v828 = vlaneseq
    %v829 = vshrl.u32 %v828, 7
    %v830 = vsub.s32 0, %v829
    %v831 = vrot.slane %v826, %v830
    %v837 = vunpack.c.l.b16 %v822
    %v838 = vunpack.c.l.b16 %v823
    %v839 = vunpack.c.l.b16 %v824
    %v840 = vunpack.c.l.b16 %v825
    %v841 = vpack.c.b16 %v838, %v837
    %v842 = vpack.c.b16 %v840, %v839
    %v846 = vsel %vm93, %v821, 0
    %848 = vmatprep.subr.bf16.mxu0 0
    %849 = vmatpush1.bf16.msra.mxu0 0
    %850 = vmatprep.subr.bf16.mxu0 0
    %851 = vmatpush1.bf16.msra.mxu0 0
    %852 = vmatprep.subr.bf16.mxu0 0
    %853 = vmatpush1.bf16.msra.mxu0 0
    %854 = vmatprep.subr.bf16.mxu0 0
    %855 = vmatpush1.bf16.msra.mxu0 0
    %856 = vmatprep.subr.bf16.mxu0 0
    %857 = vmatpush1.bf16.msra.mxu0 0
    %858 = vmatprep.subr.bf16.mxu0 0
    %859 = vmatpush1.bf16.msra.mxu0 0
    %860 = vmatprep.subr.bf16.mxu0 0
    %861 = vmatpush1.bf16.msra.mxu0 %v842
    %862 = vmatprep.subr.bf16.mxu0 0
    %863 = vmatpush1.bf16.msra.mxu0 %v841
    %864 = vmatprep.subr.bf16.mxu0 0
    %865 = vmatpush2.bf16.msra.mxu0 0
    %866 = vmatprep.subr.bf16.mxu0 0
    %867 = vmatpush2.bf16.msra.mxu0 0
    %868 = vmatprep.subr.bf16.mxu0 0
    %869 = vmatpush2.bf16.msra.mxu0 0
    %870 = vmatprep.subr.bf16.mxu0 0
    %871 = vmatpush2.bf16.msra.mxu0 0
    %872 = vmatprep.subr.bf16.mxu0 0
    %873 = vmatpush2.bf16.msra.mxu0 0
    %874 = vmatprep.subr.bf16.mxu0 0
    %875 = vmatpush2.bf16.msra.mxu0 0
    %876 = vmatprep.subr.bf16.mxu0 0
    %877 = vmatpush2.bf16.msra.mxu0 0
    %878 = vmatprep.subr.bf16.mxu0 0
    %879 = vmatpush2.bf16.msra.mxu0 0
    %880 = vmatprep.mubr.bf16.mxu0 0
    %881 = vmatmul.mubr.bf16.gmra.mxu0 %v846
    %v882 = vpop.f32.mrf.mxu0
    %v883 = vadd.f32 %v831, %v882
    %v884 = vpop.f32.mrf.mxu0
    %v885 = vpop.f32.mrf.mxu0
    %v886 = vpop.f32.mrf.mxu0
    %887 = vdwg.mxu0
    %888 = vst [vmem:[#allocation11] sm:$0xff] %v883
    // Predicated region
    $region34: #{tpu_custom_call.1} parent=1 // pred_check
      _
    $region35: #{tpu_custom_call.1} parent=1 // pred_check_branch
      %890 = sbr.rel (0) target = $region37
    $region36: #{tpu_custom_call.1} parent=1 // pred_region
      %s892 = ssub.s32 128, 128
      %893 = vsyncadd [#allocation7], %s892
      %s895 = sshll.u32 [#allocation11], 4
      %s896 = int_to_ptr.vmem [resolvable:$true] %s895
      %898 = dma.vmem_to_hbm [thread:$0]  %s896, 128, %s4, [#allocation7]
    $region37: #{tpu_custom_call.1} parent=1 // pred_fallthru
      _
    // Predicated region
    $region38: #{tpu_custom_call.1} parent=1 // pred_check
      _
    $region39: #{tpu_custom_call.1} parent=1 // pred_check_branch
      %900 = sbr.rel (0) target = $region41
    $region40: #{tpu_custom_call.1} parent=1 // pred_region
      %901 = dma.done [#allocation7], 128
    $region41: #{tpu_custom_call.1} parent=1 // pred_fallthru
      _
    %902 = vsyncpa [#allocation6], 1
    %903 = vsyncpa [#allocation9], 1
    %904 = vsyncpa [#allocation7], 1

</llo_original>
